<compile_context>
chip_gen: v7x
topology: tpu7x:2x2x1
jax: 0.10.0
libtpu: 0.0.40
codegen_flags: <defaults>
</compile_context>

<pallas_src>
import math

import jax
import jax.numpy as jnp
from jax.experimental import pallas as pl
from jax.experimental.pallas import tpu as pltpu


# ----------------------------------------------------------------------------
# helpers
# ----------------------------------------------------------------------------
def _cdiv(a, b):
    return -(-a // b)


def _round_up(v, m):
    return _cdiv(v, m) * m


def _sublane_pad(rows, dtype):
    """Rows padded to the hardware sublane tile (8 for f32, 16 for bf16, ...)."""
    itemsize = jnp.dtype(dtype).itemsize
    return _round_up(rows, 8 * max(1, 4 // itemsize))


def _block_bytes(shape, dtype, buffers=1):
    """VMEM footprint of one block, padded to the (sublane, 128) register tile."""
    s = list(shape)
    if len(s) >= 1:
        s[-1] = _round_up(s[-1], 128)
    if len(s) >= 2:
        s[-2] = _sublane_pad(s[-2], dtype)
    return buffers * math.prod(s) * jnp.dtype(dtype).itemsize


def _scoped_vmem_cap():
    """Per-generation scoped-VMEM cap: ~3/4 of physical VMEM.

    -> ~48 MiB on v7x (64 MiB physical), ~96 MiB on v5e/v6e (128 MiB physical).
    Falls back to the v7x-conservative value if the query is unavailable.
    """
    phys = 64 * 1024 * 1024
    try:
        phys = int(getattr(pltpu.get_tpu_info(), "vmem_capacity_bytes", phys))
    except Exception:
        pass
    return (phys * 3) // 4


def _choose_tiling(hw, batch, tile_cap, tile_hw):
    """Pick (tile, n_inner, n_outer) with tile a multiple of 128 and <= tile_cap."""
    if tile_hw is not None:
        if tile_hw % 128 != 0:
            raise ValueError("tile_hw must be a multiple of 128")
        tile = tile_hw
        n_t = _cdiv(hw, tile)
    else:
        hw128 = _round_up(hw, 128)
        n_t = _cdiv(hw128, tile_cap)
        if batch == 1 and hw128 >= 256:
            # Single-image inference: split pixels so both v7x TCs get work.
            n_t = max(n_t, 2)
        tile = _round_up(_cdiv(hw, n_t), 128)     # balanced tiles, <= tile_cap
        n_t = _cdiv(hw, tile)
    n_outer = 2 if (batch == 1 and n_t >= 2 and n_t % 2 == 0) else 1
    return tile, n_t // n_outer, n_outer


# ----------------------------------------------------------------------------
# Single fused kernel, grid = (B, n_outer, n_inner):
#   feat   = relu(W1ᵀ @ x_tile + b1)          (Ch, TILE)   per-pixel 1x1 conv
#   hm     = sigmoid(W2ᵀ @ feat + b2)         (K, TILE)    lane-dense store
#   fsum  += sum_over_pixels(feat)            GAP partial, VMEM scratch
#   last inner tile: write fsum to the per-(b, outer) partial-sum output.
# The inner pixel axis is the reduction axis for fsum/psum (kept last).
# ----------------------------------------------------------------------------
def _fused_kernel(x_ref, w1t_ref, b1_ref, w2t_ref, b2_ref,
                  hm_ref, psum_ref, fsum_ref):
    t = pl.program_id(2)

    @pl.when(t == 0)
    def _():
        fsum_ref[...] = jnp.zeros_like(fsum_ref)

    x = x_ref[...]                                           # (Cin, TILE)
    feat = jnp.maximum(
        jnp.dot(w1t_ref[...], x, preferred_element_type=jnp.float32)
        + b1_ref[...],
        0.0,
    )                                                        # (Ch, TILE) f32

    logits = (
        jnp.dot(w2t_ref[...], feat, preferred_element_type=jnp.float32)
        + b2_ref[...]
    )                                                        # (K, TILE)
    hm_ref[...] = jax.nn.sigmoid(logits).astype(hm_ref.dtype)   # lane-dense

    # GAP partial sum (cross-lane reduce -> XLU slot).
    # TODO(synk): lane-wide (Ch, 128) accumulator (VPU adds + one final 128->1
    # reduce) deferred until DMA stops being the binding slot.
    fsum_ref[...] += jnp.sum(feat, axis=1, keepdims=True)    # (Ch, 1)

    # Emit the per-(batch, outer-chunk) partial GAP sum on the last inner tile
    # while it is still resident in VMEM; mean + cls matmul finish in JAX.
    @pl.when(t == pl.num_programs(2) - 1)
    def _():
        psum_ref[...] = fsum_ref[...]


# ----------------------------------------------------------------------------
# wrapper
# ----------------------------------------------------------------------------
def keypoints_gauss_forward(x_nchw, params, *, num_keypoints, tile_hw=None,
                            activation_dtype=None, heatmap_dtype=jnp.float32):
    """Forward pass. x_nchw: (B, Cin, H, W). Returns (heatmaps NCHW, cls)."""
    w1, b1, w2, b2, wc, bc = (params["w1"], params["b1"], params["w2"],
                              params["b2"], params["wc"], params["bc"])
    B, Cin, H, W = x_nchw.shape
    Ch = w1.shape[1]
    K = w2.shape[1]
    NC = wc.shape[1]
    HW = H * W

    act_dtype = jnp.dtype(x_nchw.dtype if activation_dtype is None
                          else activation_dtype)
    hm_dtype = jnp.dtype(heatmap_dtype)

    # --- exact VMEM accounting (double-buffered pixel blocks + resident
    #     weights) with 20% headroom + 2 MiB compiler-internal scratch --------
    fixed_bytes = (
        _block_bytes((Ch, Cin), act_dtype, 2)        # w1t
        + _block_bytes((Ch, 1), jnp.float32, 2)      # b1
        + _block_bytes((K, Ch), jnp.float32, 2)      # w2t
        + _block_bytes((K, 1), jnp.float32, 2)       # b2
        + _block_bytes((Ch, 1), jnp.float32, 2)      # psum output block
        + _block_bytes((Ch, 1), jnp.float32, 1))     # fsum scratch
    per_px_bytes = (2 * _sublane_pad(Cin, act_dtype) * act_dtype.itemsize
                    + 2 * _sublane_pad(K, hm_dtype) * hm_dtype.itemsize)
    scoped_cap = _scoped_vmem_cap()
    budget = (scoped_cap * 4) // 5 - (2 << 20) - fixed_bytes
    tile_cap = max(128, (budget // per_px_bytes) // 128 * 128)

    tile, n_inner, n_outer = _choose_tiling(HW, B, tile_cap, tile_hw)
    n_t = n_inner * n_outer
    HW_p = n_t * tile
    n_pad = HW_p - HW

    # Native NCHW flattening -- no transpose of the (large) activation tensor.
    x_flat = x_nchw.reshape(B, Cin, HW)
    if act_dtype != x_nchw.dtype:
        x_flat = x_flat.astype(act_dtype)            # bf16 streaming path
    if n_pad:
        x_flat = jnp.pad(x_flat, ((0, 0), (0, 0), (0, n_pad)))

    # Tiny one-time weight re-layouts (channels-out on sublanes).
    w1t = w1.T.astype(act_dtype)                     # (Ch, Cin)
    b1c = b1.reshape(Ch, 1).astype(jnp.float32)
    w2t = w2.T.astype(jnp.float32)                   # (K, Ch)
    b2c = b2.reshape(K, 1).astype(jnp.float32)

    def x_map(b, o, t):
        return (b, 0, o * n_inner + t)

    def hm_map(b, o, t):
        return (b, 0, o * n_inner + t)

    def w_map(b, o, t):
        return (0, 0)

    hm_flat, psum = pl.pallas_call(
        _fused_kernel,
        out_shape=(
            jax.ShapeDtypeStruct((B, K, HW_p), hm_dtype),
            jax.ShapeDtypeStruct((B, n_outer, Ch, 1), jnp.float32),
        ),
        grid_spec=pltpu.PrefetchScalarGridSpec(
            num_scalar_prefetch=0,
            grid=(B, n_outer, n_inner),
            in_specs=[
                # Size-1 batch dim squeezed out -> kernel sees plain 2-D slabs.
                pl.BlockSpec((None, Cin, tile), x_map),
                # Constant-index weight blocks stay resident across (o, t).
                pl.BlockSpec((Ch, Cin), w_map),
                pl.BlockSpec((Ch, 1), w_map),
                pl.BlockSpec((K, Ch), w_map),
                pl.BlockSpec((K, 1), w_map),
            ],
            out_specs=[
                pl.BlockSpec((None, K, tile), hm_map),
                pl.BlockSpec((None, None, Ch, 1), lambda b, o, t: (b, o, 0, 0)),
            ],
            scratch_shapes=[pltpu.VMEM((Ch, 1), jnp.float32)],
        ),
        compiler_params=pltpu.CompilerParams(
            dimension_semantics=("parallel", "parallel", "arbitrary"),
            vmem_limit_bytes=int(scoped_cap),
        ),
    )(x_flat, w1t, b1c, w2t, b2c)

    # (B, K, HW_p) is channel-major: slice padding off, reshape to NCHW.
    # [:, :num_keypoints] mirrors the PyTorch forward.
    heatmaps = hm_flat[:, :, :HW].reshape(B, K, H, W)[:, :num_keypoints]

    # Classification head epilogue (tiny): combine partial GAP sums, correct
    # exactly for zero-padded pixels (each contributes relu(b1)), mean, matmul.
    fsum = jnp.sum(psum[..., 0], axis=1)             # (B, Ch)
    if n_pad:
        fsum = fsum - float(n_pad) * jnp.maximum(
            b1.reshape(1, Ch).astype(jnp.float32), 0.0)
    gap = fsum / float(HW)
    cls = gap @ wc.astype(jnp.float32) + bc.reshape(1, NC).astype(jnp.float32)
    return heatmaps, cls


# ----------------------------------------------------------------------------
# pure-JAX reference
# ----------------------------------------------------------------------------
def _reference(x_nchw, params, *, num_keypoints):
    w1, b1, w2, b2, wc, bc = (params["w1"], params["b1"], params["w2"],
                              params["b2"], params["wc"], params["bc"])
    B, Cin, H, W = x_nchw.shape
    x = jnp.transpose(x_nchw, (0, 2, 3, 1)).reshape(B, H * W, Cin)
    feat = jnp.maximum(x @ w1 + b1, 0.0)
    hm = jax.nn.sigmoid(feat @ w2 + b2)
    heatmap = jnp.transpose(hm.reshape(B, H, W, -1), (0, 3, 1, 2))
    gap = jnp.mean(feat, axis=1)
    cls = gap @ wc + bc
    return heatmap[:, :num_keypoints], cls


if __name__ == "__main__":
    # Small synthetic config consistent with the module's interface.
    B, Cin, H, W = 2, 4, 16, 16
    hidden = 32
    num_keypoints = 4
    num_classes = 3

    key = jax.random.PRNGKey(0)
    k_x, k_w1, k_b1, k_w2, k_b2, k_wc, k_bc = jax.random.split(key, 7)

    x = jax.random.normal(k_x, (B, Cin, H, W), dtype=jnp.float32)
    params = {
        "w1": jax.random.normal(k_w1, (Cin, hidden), jnp.float32) * 0.1,
        "b1": jax.random.normal(k_b1, (1, hidden), jnp.float32) * 0.1,
        "w2": jax.random.normal(k_w2, (hidden, num_keypoints), jnp.float32) * 0.1,
        "b2": jax.random.normal(k_b2, (1, num_keypoints), jnp.float32) * 0.1,
        "wc": jax.random.normal(k_wc, (hidden, num_classes), jnp.float32) * 0.1,
        "bc": jax.random.normal(k_bc, (1, num_classes), jnp.float32) * 0.1,
    }

    ref_hm, ref_cls = _reference(x, params, num_keypoints=num_keypoints)

    # 1) Default f32, auto (VMEM-budget-driven) tile -> one spatial step.
    hm1, cls1 = keypoints_gauss_forward(x, params, num_keypoints=num_keypoints)
    hm1, cls1 = jax.block_until_ready(hm1), jax.block_until_ready(cls1)
    assert hm1.shape == (B, num_keypoints, H, W) and cls1.shape == (B, num_classes)
    assert jnp.allclose(hm1, ref_hm, atol=1e-4, rtol=1e-4)
    assert jnp.allclose(cls1, ref_cls, atol=1e-4, rtol=1e-4)

    # 2) Forced 128-px tiles -> multi-step inner loop, GAP accumulator in VMEM.
    hm2, cls2 = keypoints_gauss_forward(
        x, params, num_keypoints=num_keypoints, tile_hw=128)
    hm2, cls2 = jax.block_until_ready(hm2), jax.block_until_ready(cls2)
    assert jnp.allclose(hm2, ref_hm, atol=1e-4, rtol=1e-4)
    assert jnp.allclose(cls2, ref_cls, atol=1e-4, rtol=1e-4)

    # 3) bf16 streaming path (halved HBM traffic); looser tolerance vs f32 ref.
    hm3, cls3 = keypoints_gauss_forward(
        x, params, num_keypoints=num_keypoints,
        activation_dtype=jnp.bfloat16, heatmap_dtype=jnp.bfloat16)
    hm3, cls3 = jax.block_until_ready(hm3), jax.block_until_ready(cls3)
    assert jnp.allclose(hm3.astype(jnp.float32), ref_hm, atol=5e-2, rtol=5e-2)
    assert jnp.allclose(cls3, ref_cls, atol=5e-2, rtol=5e-2)

    # 4) B == 1 -> pixel axis split over the outer "parallel" grid axis
    #    (both v7x TensorCores), partial GAP sums combined in JAX.
    x1 = x[:1]
    r_hm1, r_cls1 = _reference(x1, params, num_keypoints=num_keypoints)
    hm4, cls4 = keypoints_gauss_forward(x1, params, num_keypoints=num_keypoints)
    hm4, cls4 = jax.block_until_ready(hm4), jax.block_until_ready(cls4)
    assert hm4.shape == (1, num_keypoints, H, W) and cls4.shape == (1, num_classes)
    assert jnp.allclose(hm4, r_hm1, atol=1e-4, rtol=1e-4)
    assert jnp.allclose(cls4, r_cls1, atol=1e-4, rtol=1e-4)

    # 5) Non-128-multiple spatial size -> padded pixel axis + exact GAP fix-up.
    x5 = jax.random.normal(k_x, (B, Cin, 10, 12), dtype=jnp.float32)
    r_hm5, r_cls5 = _reference(x5, params, num_keypoints=num_keypoints)
    hm5, cls5 = keypoints_gauss_forward(x5, params, num_keypoints=num_keypoints)
    hm5, cls5 = jax.block_until_ready(hm5), jax.block_until_ready(cls5)
    assert hm5.shape == (B, num_keypoints, 10, 12)
    assert jnp.allclose(hm5, r_hm5, atol=1e-4, rtol=1e-4)
    assert jnp.allclose(cls5, r_cls5, atol=1e-4, rtol=1e-4)

    print("KERNEL_OK")
</pallas_src>

<mosaic_0001>
module attributes {stable_mosaic.version = 11 : i64} {
  func.func @_fused_kernel(%arg0: i32, %arg1: i32, %arg2: i32, %arg3: memref<1x4x256xf32, #tpu.memory_space<vmem>>, %arg4: memref<32x4xf32, #tpu.memory_space<vmem>>, %arg5: memref<32x1xf32, #tpu.memory_space<vmem>>, %arg6: memref<4x32xf32, #tpu.memory_space<vmem>>, %arg7: memref<4x1xf32, #tpu.memory_space<vmem>>, %arg8: memref<1x4x256xf32, #tpu.memory_space<vmem>>, %arg9: memref<1x1x32x1xf32, #tpu.memory_space<vmem>>, %arg10: memref<32x1xf32, #tpu.memory_space<vmem>>) attributes {dimension_semantics = [#tpu.dimension_semantics<parallel>, #tpu.dimension_semantics<parallel>, #tpu.dimension_semantics<arbitrary>], iteration_bounds = array<i64: 2, 1, 1>, scalar_prefetch = 0 : i64, scratch_operands = 1 : i64, tpu.core_type = #tpu.core_type<tc>, window_params = [{transform_indices = @transform_0, window_bounds = array<i64: 1, 4, 256>}, {pipeline_mode = #tpu.pipeline_mode<synchronous>, transform_indices = @transform_1, window_bounds = array<i64: 32, 4>}, {pipeline_mode = #tpu.pipeline_mode<synchronous>, transform_indices = @transform_2, window_bounds = array<i64: 32, 1>}, {pipeline_mode = #tpu.pipeline_mode<synchronous>, transform_indices = @transform_3, window_bounds = array<i64: 4, 32>}, {pipeline_mode = #tpu.pipeline_mode<synchronous>, transform_indices = @transform_4, window_bounds = array<i64: 4, 1>}, {transform_indices = @transform_5, window_bounds = array<i64: 1, 4, 256>}, {transform_indices = @transform_6, window_bounds = array<i64: 1, 1, 32, 1>}]} {
    %c0_i32 = arith.constant 0 : i32
    %0 = arith.cmpi eq, %arg2, %c0_i32 : i32
    %1 = arith.extui %0 : i1 to i32
    %c0_i32_0 = arith.constant 0 : i32
    %2 = arith.cmpi ne, %1, %c0_i32_0 : i32
    scf.if %2 {
      %cst_24 = arith.constant 0.000000e+00 : f32
      %33 = vector.broadcast %cst_24 : f32 to vector<32x1xf32>
      %c0_25 = arith.constant 0 : index
      %c0_26 = arith.constant 0 : index
      %34 = vector.load %arg10[%c0_25, %c0_26] : memref<32x1xf32, #tpu.memory_space<vmem>>, vector<32x1xf32>
      tpu.vector_store %arg10[%c0_25, %c0_26], %33 {strides = array<i32>} : memref<32x1xf32, #tpu.memory_space<vmem>>, vector<32x1xf32>,
    } else {
    }
    %c0 = arith.constant 0 : index
    %c0_1 = arith.constant 0 : index
    %c0_2 = arith.constant 0 : index
    %3 = vector.load %arg3[%c0, %c0_1, %c0_2] : memref<1x4x256xf32, #tpu.memory_space<vmem>>, vector<1x4x256xf32>
    %4 = vector.shape_cast %3 : vector<1x4x256xf32> to vector<4x256xf32>
    %c0_3 = arith.constant 0 : index
    %c0_4 = arith.constant 0 : index
    %5 = vector.load %arg4[%c0_3, %c0_4] : memref<32x4xf32, #tpu.memory_space<vmem>>, vector<32x4xf32>
    %cst = arith.constant dense<0.000000e+00> : vector<32x256xf32>
    %6 = tpu.matmul %5, %4, %cst {dimension_numbers = #tpu.dot_dimension_numbers<[1], [0], [0], [1], [0, 0, 1, 1], [], []>} : vector<32x4xf32>, vector<4x256xf32>, vector<32x256xf32> -> vector<32x256xf32>
    %c0_5 = arith.constant 0 : index
    %c0_6 = arith.constant 0 : index
    %7 = vector.load %arg5[%c0_5, %c0_6] : memref<32x1xf32, #tpu.memory_space<vmem>>, vector<32x1xf32>
    %8 = vector.broadcast %7 : vector<32x1xf32> to vector<32x256xf32>
    %9 = arith.addf %6, %8 : vector<32x256xf32>
    %cst_7 = arith.constant 0.000000e+00 : f32
    %10 = vector.broadcast %cst_7 : f32 to vector<32x256xf32>
    %11 = arith.maximumf %9, %10 : vector<32x256xf32>
    %c0_8 = arith.constant 0 : index
    %c0_9 = arith.constant 0 : index
    %12 = vector.load %arg6[%c0_8, %c0_9] : memref<4x32xf32, #tpu.memory_space<vmem>>, vector<4x32xf32>
    %cst_10 = arith.constant dense<0.000000e+00> : vector<4x256xf32>
    %13 = tpu.matmul %12, %11, %cst_10 {dimension_numbers = #tpu.dot_dimension_numbers<[1], [0], [0], [1], [0, 0, 1, 1], [], []>} : vector<4x32xf32>, vector<32x256xf32>, vector<4x256xf32> -> vector<4x256xf32>
    %c0_11 = arith.constant 0 : index
    %c0_12 = arith.constant 0 : index
    %14 = vector.load %arg7[%c0_11, %c0_12] : memref<4x1xf32, #tpu.memory_space<vmem>>, vector<4x1xf32>
    %15 = vector.broadcast %14 : vector<4x1xf32> to vector<4x256xf32>
    %16 = arith.addf %13, %15 : vector<4x256xf32>
    %17 = arith.negf %16 : vector<4x256xf32>
    %18 = math.exp %17 : vector<4x256xf32>
    %cst_13 = arith.constant 1.000000e+00 : f32
    %19 = vector.broadcast %cst_13 : f32 to vector<4x256xf32>
    %20 = arith.addf %19, %18 : vector<4x256xf32>
    %21 = arith.divf %19, %20 : vector<4x256xf32>
    %c0_14 = arith.constant 0 : index
    %c0_15 = arith.constant 0 : index
    %c0_16 = arith.constant 0 : index
    %22 = vector.load %arg8[%c0_14, %c0_15, %c0_16] : memref<1x4x256xf32, #tpu.memory_space<vmem>>, vector<1x4x256xf32>
    %23 = vector.shape_cast %22 : vector<1x4x256xf32> to vector<4x256xf32>
    %24 = vector.shape_cast %21 : vector<4x256xf32> to vector<1x4x256xf32>
    tpu.vector_store %arg8[%c0_14, %c0_15, %c0_16], %24 {strides = array<i32>} : memref<1x4x256xf32, #tpu.memory_space<vmem>>, vector<1x4x256xf32>,
    %c0_17 = arith.constant 0 : index
    %c0_18 = arith.constant 0 : index
    %25 = vector.load %arg10[%c0_17, %c0_18] : memref<32x1xf32, #tpu.memory_space<vmem>>, vector<32x1xf32>
    %cst_19 = arith.constant dense<0.000000e+00> : vector<32xf32>
    %26 = vector.multi_reduction <add>, %11, %cst_19 [1] : vector<32x256xf32> to vector<32xf32>
    %27 = vector.shape_cast %26 : vector<32xf32> to vector<32x1xf32>
    %28 = arith.addf %25, %27 : vector<32x1xf32>
    %c0_20 = arith.constant 0 : index
    %c0_21 = arith.constant 0 : index
    %29 = vector.load %arg10[%c0_20, %c0_21] : memref<32x1xf32, #tpu.memory_space<vmem>>, vector<32x1xf32>
    tpu.vector_store %arg10[%c0_20, %c0_21], %28 {strides = array<i32>} : memref<32x1xf32, #tpu.memory_space<vmem>>, vector<32x1xf32>,
    %c0_i32_22 = arith.constant 0 : i32
    %30 = arith.cmpi eq, %arg2, %c0_i32_22 : i32
    %31 = arith.extui %30 : i1 to i32
    %c0_i32_23 = arith.constant 0 : i32
    %32 = arith.cmpi ne, %31, %c0_i32_23 : i32
    scf.if %32 {
      %c0_24 = arith.constant 0 : index
      %c0_25 = arith.constant 0 : index
      %33 = vector.load %arg10[%c0_24, %c0_25] : memref<32x1xf32, #tpu.memory_space<vmem>>, vector<32x1xf32>
      %c0_26 = arith.constant 0 : index
      %c0_27 = arith.constant 0 : index
      %c0_28 = arith.constant 0 : index
      %c0_29 = arith.constant 0 : index
      %34 = vector.load %arg9[%c0_26, %c0_27, %c0_28, %c0_29] : memref<1x1x32x1xf32, #tpu.memory_space<vmem>>, vector<1x1x32x1xf32>
      %35 = vector.shape_cast %34 : vector<1x1x32x1xf32> to vector<32x1xf32>
      %36 = vector.shape_cast %33 : vector<32x1xf32> to vector<1x1x32x1xf32>
      tpu.vector_store %arg9[%c0_26, %c0_27, %c0_28, %c0_29], %36 {strides = array<i32>} : memref<1x1x32x1xf32, #tpu.memory_space<vmem>>, vector<1x1x32x1xf32>,
    } else {
    }
    return
  }
  func.func @transform_0(%arg0: i32, %arg1: i32, %arg2: i32) -> (i32, i32, i32) {
    %c1_i32 = arith.constant 1 : i32
    %0 = arith.muli %arg1, %c1_i32 : i32
    %1 = arith.addi %0, %arg2 : i32
    %c0_i32 = arith.constant 0 : i32
    %c0_i32_0 = arith.constant 0 : i32
    return %arg0, %c0_i32, %1 : i32, i32, i32
  }
  func.func @transform_1(%arg0: i32, %arg1: i32, %arg2: i32) -> (i32, i32) {
    %c0_i32 = arith.constant 0 : i32
    %c0_i32_0 = arith.constant 0 : i32
    %c0_i32_1 = arith.constant 0 : i32
    return %c0_i32, %c0_i32_0 : i32, i32
  }
  func.func @transform_2(%arg0: i32, %arg1: i32, %arg2: i32) -> (i32, i32) {
    %c0_i32 = arith.constant 0 : i32
    %c0_i32_0 = arith.constant 0 : i32
    %c0_i32_1 = arith.constant 0 : i32
    return %c0_i32, %c0_i32_0 : i32, i32
  }
  func.func @transform_3(%arg0: i32, %arg1: i32, %arg2: i32) -> (i32, i32) {
    %c0_i32 = arith.constant 0 : i32
    %c0_i32_0 = arith.constant 0 : i32
    %c0_i32_1 = arith.constant 0 : i32
    return %c0_i32, %c0_i32_0 : i32, i32
  }
  func.func @transform_4(%arg0: i32, %arg1: i32, %arg2: i32) -> (i32, i32) {
    %c0_i32 = arith.constant 0 : i32
    %c0_i32_0 = arith.constant 0 : i32
    %c0_i32_1 = arith.constant 0 : i32
    return %c0_i32, %c0_i32_0 : i32, i32
  }
  func.func @transform_5(%arg0: i32, %arg1: i32, %arg2: i32) -> (i32, i32, i32) {
    %c1_i32 = arith.constant 1 : i32
    %0 = arith.muli %arg1, %c1_i32 : i32
    %1 = arith.addi %0, %arg2 : i32
    %c0_i32 = arith.constant 0 : i32
    %c0_i32_0 = arith.constant 0 : i32
    return %arg0, %c0_i32, %1 : i32, i32, i32
  }
  func.func @transform_6(%arg0: i32, %arg1: i32, %arg2: i32) -> (i32, i32, i32, i32) {
    %c0_i32 = arith.constant 0 : i32
    %c0_i32_0 = arith.constant 0 : i32
    %c0_i32_1 = arith.constant 0 : i32
    return %arg0, %arg1, %c0_i32, %c0_i32_0 : i32, i32, i32, i32
  }
}

</mosaic_0001>

<llo_original>
// kernel: tpu_custom_call.1
$region0: #{tpu_custom_call.1}
  #allocation0 [shape = 'u32[]', space=smem, size = 0x4, offset = 0x4, fixed_abs, tag = 'smem constant byte address 0x4 - core index']
  #allocation1 [shape = 'u32[144,128]{1,0:T(1,128)}', space=vmem, size = 0x12000, scoped, tag = 'internal scratch']
  #allocation2 [shape = 'f32[32,1]{1,0:T(8,128)}', space=vmem, size = 0x4000, scoped, tag = 'scratch operand']
  %s0 = inlined_call_operand.vmem [shape: f32[2,4,256], index: 0, kind: input, shape index: {}]
  %s1 = inlined_call_operand.vmem [shape: f32[32,4], index: 1, kind: input, shape index: {}]
  %s2 = inlined_call_operand.vmem [shape: f32[32,1], index: 2, kind: input, shape index: {}]
  %s3 = inlined_call_operand.vmem [shape: f32[4,32], index: 3, kind: input, shape index: {}]
  %s4 = inlined_call_operand.vmem [shape: f32[4,1], index: 4, kind: input, shape index: {}]
  %s5 = inlined_call_operand.hbm [shape: f32[2,4,256], index: 5, kind: output, shape index: {0}]
  %s6 = inlined_call_operand.vmem [shape: f32[2,1,32,1], index: 6, kind: output, shape index: {1}]
  %7 = xla_tuple %s5, %s6
  %s8 = sld [smem:[#allocation0]]
  $region69: #{tpu_custom_call.1} parent=0
    _
  %s10 = ssub.s32 1, %s8
  %s11 = scalar_select 0, %s10, %s8
  $region1: #{tpu_custom_call.1} parent=0
    #allocation3 [shape = 'u8[8192]{0}', space=vmem, size = 0x2000, scoped, tag = 'output window, operand 0']
    #allocation4 [shape = 's32[2]{0}', space=sflag, size = 0x8, scoped, tag = 'scoped memory for tpu_custom_call.1']
    %12 = vsyncpa [#allocation4], 0
    %s13 = scalar_lea.sflag [#allocation4], 1
    %14 = vsyncpa %s13, 0
    loop: start=0, step=1, limit=4
    $region2: #{tpu_custom_call.1} parent=1 // loop_pre_header
      _
    $region3: #{tpu_custom_call.1} parent=1 // loop_header
      %s16 = sphi 0, %s20
      %p17 = scmp.ge.s32.totalorder %s16, 4
      %s23 = sphi 0, %s42
      %s24 = sphi 0, %s38
      %s25 = sphi 0, %s34
      %s26 = sphi 0, %s23
      %s27 = sphi 0, %s24
      %s28 = sphi 0, %s25
      %s29 = sphi 0, %s26
      %s30 = sphi 0, %s27
      %s31 = sphi 0, %s28
      %s49 = sphi 0, %s51
      %s52 = sphi 0, %s49
      %s53 = sphi 0, %s52
      %s69 = sphi 0, %s53
      %s73 = sphi 0, %s73
      %s75 = sphi 0, %s73
      %s76 = sphi 0, %s75
      %s90 = sphi 0, %s76
      %s94 = sphi 0, %s94
      %s96 = sphi 0, %s94
      %s97 = sphi 0, %s96
      %s111 = sphi 0, %s97
      %s115 = sphi 0, %s115
      %s117 = sphi 0, %s115
      %s118 = sphi 0, %s117
      %s132 = sphi 0, %s118
      %s136 = sphi 0, %s136
      %s138 = sphi 0, %s136
      %s139 = sphi 0, %s138
      %s153 = sphi 0, %s139
      %s163 = sphi 0, %s165
      %s166 = sphi 0, %s163
      %s167 = sphi 0, %s166
      %s183 = sphi 0, %s167
      %s191 = sphi 0, %s193
      %s194 = sphi 0, %s191
      %s195 = sphi 0, %s194
      %s211 = sphi 0, %s195
    $region4: #{tpu_custom_call.1} parent=1 // loop_header_branch
      %19 = sbr.rel (%p17) target = $region8
    $region5: #{tpu_custom_call.1} parent=1 // loop_body
      %s21 = ssub.s32 %s16, 1
      %s22 = ssub.s32 %s16, 2
      %s32 = sadd.s32 1, %s25
      %p33 = scmp.ge.s32.totalorder %s32, 1
      %s34 = scalar_select %p33, 0, %s32
      %s35 = sadd.s32 1, %s24
      %s36 = scalar_select %p33, %s35, %s24
      %p37 = scmp.ge.s32.totalorder %s36, 1
      %s38 = scalar_select %p37, 0, %s36
      %s39 = sadd.s32 1, %s23
      %s40 = scalar_select %p37, %s39, %s23
      %p41 = scmp.ge.s32.totalorder %s40, 2
      %s42 = scalar_select %p41, 0, %s40
      %s43 = sadd.s32 %s24, %s25
      %s44 = sadd.s32 %s38, %s34
      %s45 = ssub.s32 %s23, %s42
      %s46 = ssub.s32 %s43, %s44
      %s47 = sor.u32 %s45, %s46
      %p48 = scmp.eq.s32.totalorder %s47, 0
      %s50 = sadd.s32 %s49, 1
      %s51 = scalar_select %p48, %s49, %s50
      %p54 = pneg %p48
      %p55 = scmp.eq.s32.totalorder %s16, 1
      %p56 = por %p54, %p55
      %p57 = scmp.ne.s32.totalorder %s49, %s52
      %p58 = scmp.eq.s32.totalorder %s16, 0
      %p59 = por %p57, %p58
      %p60 = scmp.ne.s32.totalorder %s49, %s52
      %p61 = scmp.eq.s32.totalorder %s21, 1
      %p62 = por %p60, %p61
      %p63 = scmp.ne.s32.totalorder %s52, %s53
      %p64 = scmp.eq.s32.totalorder %s21, 0
      %p65 = por %p63, %p64
      %p66 = scmp.ne.s32.totalorder %s52, %s53
      %p67 = scmp.eq.s32.totalorder %s22, 1
      %p68 = por %p66, %p67
      %p70 = scmp.ne.s32.totalorder %s53, %s69
      %p71 = scmp.eq.s32.totalorder %s22, 0
      %p72 = por %p70, %p71
      %s74 = sadd.s32 %s73, 1
      %p77 = scmp.eq.s32.totalorder %s16, 1
      %p78 = scmp.ne.s32.totalorder %s73, %s75
      %p79 = scmp.eq.s32.totalorder %s16, 0
      %p80 = por %p78, %p79
      %p81 = scmp.ne.s32.totalorder %s73, %s75
      %p82 = scmp.eq.s32.totalorder %s21, 1
      %p83 = por %p81, %p82
      %p84 = scmp.ne.s32.totalorder %s75, %s76
      %p85 = scmp.eq.s32.totalorder %s21, 0
      %p86 = por %p84, %p85
      %p87 = scmp.ne.s32.totalorder %s75, %s76
      %p88 = scmp.eq.s32.totalorder %s22, 1
      %p89 = por %p87, %p88
      %p91 = scmp.ne.s32.totalorder %s76, %s90
      %p92 = scmp.eq.s32.totalorder %s22, 0
      %p93 = por %p91, %p92
      %s95 = sadd.s32 %s94, 1
      %p98 = scmp.eq.s32.totalorder %s16, 1
      %p99 = scmp.ne.s32.totalorder %s94, %s96
      %p100 = scmp.eq.s32.totalorder %s16, 0
      %p101 = por %p99, %p100
      %p102 = scmp.ne.s32.totalorder %s94, %s96
      %p103 = scmp.eq.s32.totalorder %s21, 1
      %p104 = por %p102, %p103
      %p105 = scmp.ne.s32.totalorder %s96, %s97
      %p106 = scmp.eq.s32.totalorder %s21, 0
      %p107 = por %p105, %p106
      %p108 = scmp.ne.s32.totalorder %s96, %s97
      %p109 = scmp.eq.s32.totalorder %s22, 1
      %p110 = por %p108, %p109
      %p112 = scmp.ne.s32.totalorder %s97, %s111
      %p113 = scmp.eq.s32.totalorder %s22, 0
      %p114 = por %p112, %p113
      %s116 = sadd.s32 %s115, 1
      %p119 = scmp.eq.s32.totalorder %s16, 1
      %p120 = scmp.ne.s32.totalorder %s115, %s117
      %p121 = scmp.eq.s32.totalorder %s16, 0
      %p122 = por %p120, %p121
      %p123 = scmp.ne.s32.totalorder %s115, %s117
      %p124 = scmp.eq.s32.totalorder %s21, 1
      %p125 = por %p123, %p124
      %p126 = scmp.ne.s32.totalorder %s117, %s118
      %p127 = scmp.eq.s32.totalorder %s21, 0
      %p128 = por %p126, %p127
      %p129 = scmp.ne.s32.totalorder %s117, %s118
      %p130 = scmp.eq.s32.totalorder %s22, 1
      %p131 = por %p129, %p130
      %p133 = scmp.ne.s32.totalorder %s118, %s132
      %p134 = scmp.eq.s32.totalorder %s22, 0
      %p135 = por %p133, %p134
      %s137 = sadd.s32 %s136, 1
      %p140 = scmp.eq.s32.totalorder %s16, 1
      %p141 = scmp.ne.s32.totalorder %s136, %s138
      %p142 = scmp.eq.s32.totalorder %s16, 0
      %p143 = por %p141, %p142
      %p144 = scmp.ne.s32.totalorder %s136, %s138
      %p145 = scmp.eq.s32.totalorder %s21, 1
      %p146 = por %p144, %p145
      %p147 = scmp.ne.s32.totalorder %s138, %s139
      %p148 = scmp.eq.s32.totalorder %s21, 0
      %p149 = por %p147, %p148
      %p150 = scmp.ne.s32.totalorder %s138, %s139
      %p151 = scmp.eq.s32.totalorder %s22, 1
      %p152 = por %p150, %p151
      %p154 = scmp.ne.s32.totalorder %s139, %s153
      %p155 = scmp.eq.s32.totalorder %s22, 0
      %p156 = por %p154, %p155
      %s157 = sadd.s32 %s24, %s25
      %s158 = sadd.s32 %s38, %s34
      %s159 = ssub.s32 %s23, %s42
      %s160 = ssub.s32 %s157, %s158
      %s161 = sor.u32 %s159, %s160
      %p162 = scmp.eq.s32.totalorder %s161, 0
      %s164 = sadd.s32 %s163, 1
      %s165 = scalar_select %p162, %s163, %s164
      %p168 = pneg %p162
      %p169 = scmp.eq.s32.totalorder %s16, 1
      %p170 = por %p168, %p169
      %p171 = scmp.ne.s32.totalorder %s163, %s166
      %p172 = scmp.eq.s32.totalorder %s16, 0
      %p173 = por %p171, %p172
      %p174 = scmp.ne.s32.totalorder %s163, %s166
      %p175 = scmp.eq.s32.totalorder %s21, 1
      %p176 = por %p174, %p175
      %p177 = scmp.ne.s32.totalorder %s166, %s167
      %p178 = scmp.eq.s32.totalorder %s21, 0
      %p179 = por %p177, %p178
      %p180 = scmp.ne.s32.totalorder %s166, %s167
      %p181 = scmp.eq.s32.totalorder %s22, 1
      %p182 = por %p180, %p181
      %p184 = scmp.ne.s32.totalorder %s167, %s183
      %p185 = scmp.eq.s32.totalorder %s22, 0
      %p186 = por %p184, %p185
      %s187 = ssub.s32 %s23, %s42
      %s188 = ssub.s32 %s24, %s38
      %s189 = sor.u32 %s187, %s188
      %p190 = scmp.eq.s32.totalorder %s189, 0
      %s192 = sadd.s32 %s191, 1
      %s193 = scalar_select %p190, %s191, %s192
      %p196 = pneg %p190
      %p197 = scmp.eq.s32.totalorder %s16, 1
      %p198 = por %p196, %p197
      %p199 = scmp.ne.s32.totalorder %s191, %s194
      %p200 = scmp.eq.s32.totalorder %s16, 0
      %p201 = por %p199, %p200
      %p202 = scmp.ne.s32.totalorder %s191, %s194
      %p203 = scmp.eq.s32.totalorder %s21, 1
      %p204 = por %p202, %p203
      %p205 = scmp.ne.s32.totalorder %s194, %s195
      %p206 = scmp.eq.s32.totalorder %s21, 0
      %p207 = por %p205, %p206
      %p208 = scmp.ne.s32.totalorder %s194, %s195
      %p209 = scmp.eq.s32.totalorder %s22, 1
      %p210 = por %p208, %p209
      %p212 = scmp.ne.s32.totalorder %s195, %s211
      %p213 = scmp.eq.s32.totalorder %s22, 0
      %p214 = por %p212, %p213
      %p215 = scmp.le.s32.totalorder 1, %s16
      %p216 = scmp.lt.s32.totalorder %s16, 3
      %p217 = pnand %p215, %p216
      %p218 = pneg %p217
      // Predicated region
      $region9: #{tpu_custom_call.1} parent=5 // pred_check
        _
      $region10: #{tpu_custom_call.1} parent=5 // pred_check_branch
        %220 = sbr.rel (%p217) target = $region12
      $region11: #{tpu_custom_call.1} parent=5 // pred_region
        %s221 = ssub.s32 %s16, 1
        // Predicated region
        $region13: #{tpu_custom_call.1} parent=11 // pred_check
          %p222 = pneg %p86
        $region14: #{tpu_custom_call.1} parent=11 // pred_check_branch
          %224 = sbr.rel (%p222) target = $region16
        $region15: #{tpu_custom_call.1} parent=11 // pred_region
          _
        $region16: #{tpu_custom_call.1} parent=11 // pred_fallthru
          _
        // Predicated region
        $region17: #{tpu_custom_call.1} parent=11 // pred_check
          %p225 = pneg %p107
        $region18: #{tpu_custom_call.1} parent=11 // pred_check_branch
          %227 = sbr.rel (%p225) target = $region20
        $region19: #{tpu_custom_call.1} parent=11 // pred_region
          _
        $region20: #{tpu_custom_call.1} parent=11 // pred_fallthru
          _
        // Predicated region
        $region21: #{tpu_custom_call.1} parent=11 // pred_check
          %p228 = pneg %p128
        $region22: #{tpu_custom_call.1} parent=11 // pred_check_branch
          %230 = sbr.rel (%p228) target = $region24
        $region23: #{tpu_custom_call.1} parent=11 // pred_region
          _
        $region24: #{tpu_custom_call.1} parent=11 // pred_fallthru
          _
        // Predicated region
        $region25: #{tpu_custom_call.1} parent=11 // pred_check
          %p231 = pneg %p149
        $region26: #{tpu_custom_call.1} parent=11 // pred_check_branch
          %233 = sbr.rel (%p231) target = $region28
        $region27: #{tpu_custom_call.1} parent=11 // pred_region
          _
        $region28: #{tpu_custom_call.1} parent=11 // pred_fallthru
          _
      $region12: #{tpu_custom_call.1} parent=5 // pred_fallthru
        _
      %p234 = scmp.lt.s32.totalorder %s16, 2
      // Predicated region
      $region29: #{tpu_custom_call.1} parent=5 // pred_check
        %p235 = pneg %p234
      $region30: #{tpu_custom_call.1} parent=5 // pred_check_branch
        %237 = sbr.rel (%p235) target = $region32
      $region31: #{tpu_custom_call.1} parent=5 // pred_region
        // Predicated region
        $region33: #{tpu_custom_call.1} parent=31 // pred_check
          %p238 = pneg %p59
        $region34: #{tpu_custom_call.1} parent=31 // pred_check_branch
          %240 = sbr.rel (%p238) target = $region36
        $region35: #{tpu_custom_call.1} parent=31 // pred_region
          %s241 = sadd.s32 %s24, %s25
          %s242 = smul.u32 2, %s241
          %p243 = scmp.lt.s32.totalorder %s23, 1
          %s244 = scalar_select %p243, %s23, 1
          %p245 = scmp.lt.s32.totalorder %s242, 1
          %s246 = scalar_select %p245, %s242, 1
          %s247 = smul.addr %s244, 2
          %s248 = sadd.s32 %s246, %s247
          %s249 = smul.addr %s248, 4
          %s250 = scalar_lea.vmem %s0, %s249
          %s251 = sadd.s32 %s24, %s25
          %s252 = smul.u32 2, %s251
        $region36: #{tpu_custom_call.1} parent=31 // pred_fallthru
          _
      $region32: #{tpu_custom_call.1} parent=5 // pred_fallthru
        _
      %p253 = scmp.le.s32.totalorder 1, %s16
      %p254 = scmp.lt.s32.totalorder %s16, 3
      %p255 = pnand %p253, %p254
      %p256 = pneg %p255
      // Predicated region
      $region37: #{tpu_custom_call.1} parent=5 // pred_check
        _
      $region38: #{tpu_custom_call.1} parent=5 // pred_check_branch
        %258 = sbr.rel (%p255) target = $region40
      $region39: #{tpu_custom_call.1} parent=5 // pred_region
        %s259 = ssub.s32 %s16, 1
        %s260 = sadd.s32 %s27, %s28
        %s261 = smul.u32 2, %s260
        %p262 = scmp.lt.s32.totalorder %s26, 1
        %s263 = scalar_select %p262, %s26, 1
        %p264 = scmp.lt.s32.totalorder %s261, 1
        %s265 = scalar_select %p264, %s261, 1
        %s266 = smul.addr %s263, 2
        %s267 = sadd.s32 %s265, %s266
        %s268 = smul.addr %s267, 4
        %s269 = scalar_lea.vmem %s0, %s268
        %p270 = pneg %p65
        %p271 = pneg %p62
        %p272 = pneg %p86
        %p273 = pneg %p83
        %p274 = pneg %p107
        %p275 = pneg %p104
        %p276 = pneg %p128
        %p277 = pneg %p125
        %p278 = pneg %p149
        %p279 = pneg %p146
        %p280 = pneg %p179
        %p281 = pneg %p176
        %s282 = sand.u32 %s166, 1
        %s283 = scalar_lea.sflag [#allocation4], %s282
        %s284 = sand.u32 %s166, 1
        %s285 = smul.addr %s284, 8
        %s286 = scalar_lea.vmem [#allocation3], %s285
        %p287 = pneg %p207
        %p288 = pneg %p204
        %p289 = scmp.lt.s32.totalorder %s26, 1
        %s290 = scalar_select %p289, %s26, 1
        %p291 = scmp.lt.s32.totalorder %s27, 0
        %s292 = scalar_select %p291, %s27, 0
        %s293 = smul.addr %s292, 4
        %s294 = smul.addr %s290, 4
        %s295 = sadd.s32 %s293, %s294
        %s296 = smul.addr %s295, 8
        %s297 = scalar_lea.vmem %s6, %s296
        %s298 = sadd.s32 %s27, %s28
        %s299 = smul.u32 2, %s298
        %p300 = scmp.lt.s32.totalorder %s26, 1
        %s301 = scalar_select %p300, %s26, 1
        %p302 = scmp.lt.s32.totalorder %s299, 1
        %s303 = scalar_select %p302, %s299, 1
        %s304 = smul.addr %s301, 2
        %s305 = sadd.s32 %s303, %s304
        %s306 = smul.addr %s305, 4
        %s307 = scalar_lea.vmem %s0, %s306
        %s308 = sadd.s32 %s27, %s28
        %s309 = smul.u32 2, %s308
        %s310 = sadd.s32 %s27, %s28
        %s311 = smul.u32 2, %s310
        %p312 = scmp.lt.s32.totalorder %s26, 1
        %s313 = scalar_select %p312, %s26, 1
        %p314 = scmp.lt.s32.totalorder %s27, 0
        %s315 = scalar_select %p314, %s27, 0
        %s316 = smul.addr %s315, 4
        %s317 = smul.addr %s313, 4
        %s318 = sadd.s32 %s316, %s317
        %s319 = smul.addr %s318, 8
        %s320 = scalar_lea.vmem %s6, %s319
        %p321 = scmp.eq.s32.totalorder %s28, 0
        // Predicated region
        $region41: #{tpu_custom_call.1} parent=39 // pred_check
          %p322 = pneg %p321
        $region42: #{tpu_custom_call.1} parent=39 // pred_check_branch
          %324 = sbr.rel (%p322) target = $region44
        $region43: #{tpu_custom_call.1} parent=39 // pred_region
          %vm325 = vcmask 7168
          %326 = vst.msk [vmem:[#allocation2] sm:$0xff] %vm325, 0.0
          %327 = vst.msk [vmem:[#allocation2 + $0x8] sm:$0xff] %vm325, 0.0
          %328 = vst.msk [vmem:[#allocation2 + $0x10] sm:$0xff] %vm325, 0.0
          %329 = vst.msk [vmem:[#allocation2 + $0x18] sm:$0xff] %vm325, 0.0
        $region44: #{tpu_custom_call.1} parent=39 // pred_fallthru
          _
        %v330 = vld [vmem:[%s307] sm:$0xff]
        %v331 = vld [vmem:[%s1] sm:$0xff]
        %v332 = vld [vmem:[%s1 + $0x8] sm:$0xff]
        %v333 = vld [vmem:[%s1 + $0x10] sm:$0xff]
        %v334 = vld [vmem:[%s1 + $0x18] sm:$0xff]
        %v335 = vld [vmem:[%s2] sm:$0xff]
        %v336 = vld [vmem:[%s2 + $0x8] sm:$0xff]
        %v337 = vld [vmem:[%s2 + $0x10] sm:$0xff]
        %v338 = vld [vmem:[%s2 + $0x18] sm:$0xff]
        %340 = vset.pattern.permute.xlu0 0
        %341 = vperm.xlu0 %340, %v335
        %v342 = vpop.permute.xlu0 %341
        %345 = vset.pattern.permute.xlu0 0
        %346 = vperm.xlu0 %345, %v336
        %v347 = vpop.permute.xlu0 %346
        %350 = vset.pattern.permute.xlu0 0
        %351 = vperm.xlu0 %350, %v337
        %v352 = vpop.permute.xlu0 %351
        %355 = vset.pattern.permute.xlu0 0
        %356 = vperm.xlu0 %355, %v338
        %v357 = vpop.permute.xlu0 %356
        %v360 = vcombine.high %v330, %v330
        %vm361 = vcmask 31744
        %v363 = vsel %vm361, %v331, 0
        %v366 = vsel %vm361, %v332, 0
        %v369 = vsel %vm361, %v333, 0
        %v372 = vsel %vm361, %v334, 0
        %vm374 = vcmask 1043456
        %v375 = vsel %vm374, %v330, 0
        %v377 = vsel %vm374, %v360, 0
        %379 = vmatprep.subr.mxu0 %v377
        %380 = vmatpush1.msra.mxu0 %v375
        %381 = vmatprep.subr.mxu0 0.0
        %382 = vmatpush1.msra.mxu0 0.0
        %383 = vmatprep.subr.mxu0 0.0
        %384 = vmatpush1.msra.mxu0 0.0
        %385 = vmatprep.subr.mxu0 0.0
        %386 = vmatpush1.msra.mxu0 0.0
        %387 = vmatprep.subr.mxu0 0.0
        %388 = vmatpush1.msra.mxu0 0.0
        %389 = vmatprep.subr.mxu0 0.0
        %390 = vmatpush1.msra.mxu0 0.0
        %391 = vmatprep.subr.mxu0 0.0
        %392 = vmatpush1.msra.mxu0 0.0
        %393 = vmatprep.subr.mxu0 0.0
        %394 = vmatpush1.msra.mxu0 0.0
        %395 = vmatprep.subr.mxu0 0.0
        %396 = vmatpush1.msra.mxu0 0.0
        %397 = vmatprep.subr.mxu0 0.0
        %398 = vmatpush1.msra.mxu0 0.0
        %399 = vmatprep.subr.mxu0 0.0
        %400 = vmatpush1.msra.mxu0 0.0
        %401 = vmatprep.subr.mxu0 0.0
        %402 = vmatpush1.msra.mxu0 0.0
        %403 = vmatprep.subr.mxu0 0.0
        %404 = vmatpush1.msra.mxu0 0.0
        %405 = vmatprep.subr.mxu0 0.0
        %406 = vmatpush1.msra.mxu0 0.0
        %407 = vmatprep.subr.mxu0 0.0
        %408 = vmatpush1.msra.mxu0 0.0
        %409 = vmatprep.subr.mxu0 0.0
        %410 = vmatpush1.msra.mxu0 0.0
        %411 = vmatprep.subr.mxu0 0.0
        %412 = vmatpush1.msra.mxu0 0.0
        %413 = vmatprep.subr.mxu0 0.0
        %414 = vmatpush1.msra.mxu0 0.0
        %415 = vmatprep.subr.mxu0 0.0
        %416 = vmatpush1.msra.mxu0 0.0
        %417 = vmatprep.subr.mxu0 0.0
        %418 = vmatpush1.msra.mxu0 0.0
        %419 = vmatprep.subr.mxu0 0.0
        %420 = vmatpush1.msra.mxu0 0.0
        %421 = vmatprep.subr.mxu0 0.0
        %422 = vmatpush1.msra.mxu0 0.0
        %423 = vmatprep.subr.mxu0 0.0
        %424 = vmatpush1.msra.mxu0 0.0
        %425 = vmatprep.subr.mxu0 0.0
        %426 = vmatpush1.msra.mxu0 0.0
        %427 = vmatprep.subr.mxu0 0.0
        %428 = vmatpush1.msra.mxu0 0.0
        %429 = vmatprep.subr.mxu0 0.0
        %430 = vmatpush1.msra.mxu0 0.0
        %431 = vmatprep.subr.mxu0 0.0
        %432 = vmatpush1.msra.mxu0 0.0
        %433 = vmatprep.subr.mxu0 0.0
        %434 = vmatpush1.msra.mxu0 0.0
        %435 = vmatprep.subr.mxu0 0.0
        %436 = vmatpush1.msra.mxu0 0.0
        %437 = vmatprep.subr.mxu0 0.0
        %438 = vmatpush1.msra.mxu0 0.0
        %439 = vmatprep.subr.mxu0 0.0
        %440 = vmatpush1.msra.mxu0 0.0
        %441 = vmatprep.subr.mxu0 0.0
        %442 = vmatpush1.msra.mxu0 0.0
        %443 = vmatprep.mubr.f32.mxu0 0.0
        %444 = vmatmul.mubr.f32.gmra.mrb[0].mxu0 %v363
        %v445 = vpop.f32.mrb[0].mxu0
        %v446 = vadd.f32 %v342, %v445
        %v447 = vpop.f32.mrb[0].mxu0
        %v448 = vadd.f32 %v342, %v447
        %449 = vmatprep.mubr.f32.mxu0 0.0
        %450 = vmatmul.mubr.f32.gmra.mrb[0].mxu0 %v366
        %v451 = vpop.f32.mrb[0].mxu0
        %v452 = vadd.f32 %v347, %v451
        %v453 = vpop.f32.mrb[0].mxu0
        %v454 = vadd.f32 %v347, %v453
        %455 = vmatprep.mubr.f32.mxu0 0.0
        %456 = vmatmul.mubr.f32.gmra.mrb[0].mxu0 %v369
        %v457 = vpop.f32.mrb[0].mxu0
        %v458 = vadd.f32 %v352, %v457
        %v459 = vpop.f32.mrb[0].mxu0
        %v460 = vadd.f32 %v352, %v459
        %461 = vmatprep.mubr.f32.mxu0 0.0
        %462 = vmatmul.mubr.f32.gmra.mrb[0].mxu0 %v372
        %v463 = vpop.f32.mrb[0].mxu0
        %v464 = vadd.f32 %v357, %v463
        %v465 = vpop.f32.mrb[0].mxu0
        %v466 = vadd.f32 %v357, %v465
        %467 = vdwg.mxu0
        %v468 = vmax.f32 %v446, 0.0
        %v469 = vmax.f32 %v448, 0.0
        %v470 = vmax.f32 %v452, 0.0
        %v471 = vmax.f32 %v454, 0.0
        %v472 = vmax.f32 %v458, 0.0
        %v473 = vmax.f32 %v460, 0.0
        %v474 = vmax.f32 %v464, 0.0
        %v475 = vmax.f32 %v466, 0.0
        %v476 = vld [vmem:[%s3] sm:$0xf]
        %v477 = vld [vmem:[%s4] sm:$0xf]
        %479 = vset.pattern.permute.xlu0 0
        %480 = vperm.xlu0 %479, %v477
        %v481 = vpop.permute.xlu0 %480
        %vm483 = vcmask 261120
        %v485 = vsel %vm483, %v476, 0
        %487 = vmatprep.subr.mxu0 %v469
        %488 = vmatpush1.msra.mxu0 %v468
        %489 = vmatprep.subr.mxu0 %v471
        %490 = vmatpush1.msra.mxu0 %v470
        %491 = vmatprep.subr.mxu0 %v473
        %492 = vmatpush1.msra.mxu0 %v472
        %493 = vmatprep.subr.mxu0 %v475
        %494 = vmatpush1.msra.mxu0 %v474
        %495 = vmatprep.subr.mxu0 0.0
        %496 = vmatpush1.msra.mxu0 0.0
        %497 = vmatprep.subr.mxu0 0.0
        %498 = vmatpush1.msra.mxu0 0.0
        %499 = vmatprep.subr.mxu0 0.0
        %500 = vmatpush1.msra.mxu0 0.0
        %501 = vmatprep.subr.mxu0 0.0
        %502 = vmatpush1.msra.mxu0 0.0
        %503 = vmatprep.subr.mxu0 0.0
        %504 = vmatpush1.msra.mxu0 0.0
        %505 = vmatprep.subr.mxu0 0.0
        %506 = vmatpush1.msra.mxu0 0.0
        %507 = vmatprep.subr.mxu0 0.0
        %508 = vmatpush1.msra.mxu0 0.0
        %509 = vmatprep.subr.mxu0 0.0
        %510 = vmatpush1.msra.mxu0 0.0
        %511 = vmatprep.subr.mxu0 0.0
        %512 = vmatpush1.msra.mxu0 0.0
        %513 = vmatprep.subr.mxu0 0.0
        %514 = vmatpush1.msra.mxu0 0.0
        %515 = vmatprep.subr.mxu0 0.0
        %516 = vmatpush1.msra.mxu0 0.0
        %517 = vmatprep.subr.mxu0 0.0
        %518 = vmatpush1.msra.mxu0 0.0
        %519 = vmatprep.subr.mxu0 0.0
        %520 = vmatpush1.msra.mxu0 0.0
        %521 = vmatprep.subr.mxu0 0.0
        %522 = vmatpush1.msra.mxu0 0.0
        %523 = vmatprep.subr.mxu0 0.0
        %524 = vmatpush1.msra.mxu0 0.0
        %525 = vmatprep.subr.mxu0 0.0
        %526 = vmatpush1.msra.mxu0 0.0
        %527 = vmatprep.subr.mxu0 0.0
        %528 = vmatpush1.msra.mxu0 0.0
        %529 = vmatprep.subr.mxu0 0.0
        %530 = vmatpush1.msra.mxu0 0.0
        %531 = vmatprep.subr.mxu0 0.0
        %532 = vmatpush1.msra.mxu0 0.0
        %533 = vmatprep.subr.mxu0 0.0
        %534 = vmatpush1.msra.mxu0 0.0
        %535 = vmatprep.subr.mxu0 0.0
        %536 = vmatpush1.msra.mxu0 0.0
        %537 = vmatprep.subr.mxu0 0.0
        %538 = vmatpush1.msra.mxu0 0.0
        %539 = vmatprep.subr.mxu0 0.0
        %540 = vmatpush1.msra.mxu0 0.0
        %541 = vmatprep.subr.mxu0 0.0
        %542 = vmatpush1.msra.mxu0 0.0
        %543 = vmatprep.subr.mxu0 0.0
        %544 = vmatpush1.msra.mxu0 0.0
        %545 = vmatprep.subr.mxu0 0.0
        %546 = vmatpush1.msra.mxu0 0.0
        %547 = vmatprep.subr.mxu0 0.0
        %548 = vmatpush1.msra.mxu0 0.0
        %549 = vmatprep.subr.mxu0 0.0
        %550 = vmatpush1.msra.mxu0 0.0
        %551 = vmatprep.mubr.f32.mxu0 0.0
        %552 = vmatmul.mubr.f32.gmra.mrb[0].mxu0 %v485
        %v553 = vpop.f32.mrb[0].mxu0
        %v554 = vadd.f32 %v481, %v553
        %v555 = vpop.f32.mrb[0].mxu0
        %v556 = vadd.f32 %v481, %v555
        %557 = vdwg.mxu0
        %v558 = vxor.u32 %v554, 2147483648
        %v559 = vxor.u32 %v556, 2147483648
        %v560 = vmul.f32 %v558, 1.442695
        %v561 = vpow.pop %v560
        %v562 = vmul.f32 %v559, 1.442695
        %v563 = vpow.pop %v562
        %v564 = vadd.f32 %v561, 1.0
        %v565 = vadd.f32 %v563, 1.0
        %v566 = vrcp.pop %v564
        %v567 = vmul.f32 1.0, %v566
        %v568 = vrcp.pop %v565
        %v569 = vmul.f32 1.0, %v568
        %v572 = vcombine.low %v567, %v569
        %574 = vst [vmem:[%s286] sm:$0xff] %v572
        %v575 = vld [vmem:[#allocation2] sm:$0xff]
        %v576 = vld [vmem:[#allocation2 + $0x8] sm:$0xff]
        %v577 = vld [vmem:[#allocation2 + $0x10] sm:$0xff]
        %v578 = vld [vmem:[#allocation2 + $0x18] sm:$0xff]
        %v579 = vadd.f32 %v468, %v469
        %580 = vadd.xlane.f32.xlu0 %v579
        %v581 = vpop.xlane.xlu0 %580
        %v582 = vadd.f32 %v470, %v471
        %583 = vadd.xlane.f32.xlu0 %v582
        %v584 = vpop.xlane.xlu0 %583
        %v585 = vadd.f32 %v472, %v473
        %586 = vadd.xlane.f32.xlu0 %v585
        %v587 = vpop.xlane.xlu0 %586
        %v588 = vadd.f32 %v474, %v475
        %589 = vadd.xlane.f32.xlu0 %v588
        %v590 = vpop.xlane.xlu0 %589
        %v591 = vadd.f32 %v575, %v581
        %v592 = vadd.f32 %v576, %v584
        %v593 = vadd.f32 %v577, %v587
        %v594 = vadd.f32 %v578, %v590
        %vm595 = vcmask 7168
        %596 = vst.msk [vmem:[#allocation2] sm:$0xff] %vm595, %v591
        %597 = vst.msk [vmem:[#allocation2 + $0x8] sm:$0xff] %vm595, %v592
        %598 = vst.msk [vmem:[#allocation2 + $0x10] sm:$0xff] %vm595, %v593
        %599 = vst.msk [vmem:[#allocation2 + $0x18] sm:$0xff] %vm595, %v594
        // Predicated region
        $region45: #{tpu_custom_call.1} parent=39 // pred_check
          %p600 = pneg %p321
        $region46: #{tpu_custom_call.1} parent=39 // pred_check_branch
          %602 = sbr.rel (%p600) target = $region48
        $region47: #{tpu_custom_call.1} parent=39 // pred_region
          %v603 = vld [vmem:[#allocation2] sm:$0xff]
          %v604 = vld [vmem:[#allocation2 + $0x8] sm:$0xff]
          %v605 = vld [vmem:[#allocation2 + $0x10] sm:$0xff]
          %v606 = vld [vmem:[#allocation2 + $0x18] sm:$0xff]
          %607 = vst.msk [vmem:[%s320] sm:$0xff] %vm595, %v603
          %608 = vst.msk [vmem:[%s320 + $0x8] sm:$0xff] %vm595, %v604
          %609 = vst.msk [vmem:[%s320 + $0x10] sm:$0xff] %vm595, %v605
          %610 = vst.msk [vmem:[%s320 + $0x18] sm:$0xff] %vm595, %v606
        $region48: #{tpu_custom_call.1} parent=39 // pred_fallthru
          _
        %s611 = sand.u32 %s166, 1
        %s612 = scalar_lea.sflag [#allocation4], %s611
        %s613 = sand.u32 %s166, 1
        %s614 = smul.addr %s613, 8
        %s615 = scalar_lea.vmem [#allocation3], %s614
        %p616 = scmp.lt.s32.totalorder %s26, 1
        %s617 = scalar_select %p616, %s26, 1
        %p618 = scmp.lt.s32.totalorder %s27, 0
        %s619 = scalar_select %p618, %s27, 0
        %s620 = smul.addr %s619, 4
        %s621 = smul.addr %s617, 4
        %s622 = sadd.s32 %s620, %s621
        %s623 = smul.addr %s622, 8
        %s624 = scalar_lea.vmem %s6, %s623
        // Predicated region
        $region49: #{tpu_custom_call.1} parent=39 // pred_check
          %p625 = pneg %p176
        $region50: #{tpu_custom_call.1} parent=39 // pred_check_branch
          %627 = sbr.rel (%p625) target = $region52
        $region51: #{tpu_custom_call.1} parent=39 // pred_region
          %s628 = sadd.s32 %s27, %s28
          %s629 = smul.u32 2, %s628
          %s631 = ssub.s32 128, 128
          %632 = vsyncadd %s612, %s631
          %s633 = smul.addr %s26, 2
          %s634 = sadd.s32 %s629, %s633
          %s635 = smul.addr %s634, 64
          %s636 = scalar_lea.hbm %s5, %s635
          %s638 = sshll.u32 %s615, 4
          %s639 = int_to_ptr.vmem [resolvable:$true] %s638
          %641 = dma.vmem_to_hbm [thread:$0]  %s639, 128, %s636, %s612
        $region52: #{tpu_custom_call.1} parent=39 // pred_fallthru
          _
        // Predicated region
        $region53: #{tpu_custom_call.1} parent=39 // pred_check
          %p642 = pneg %p204
        $region54: #{tpu_custom_call.1} parent=39 // pred_check_branch
          %644 = sbr.rel (%p642) target = $region56
        $region55: #{tpu_custom_call.1} parent=39 // pred_region
          _
        $region56: #{tpu_custom_call.1} parent=39 // pred_fallthru
          _
      $region40: #{tpu_custom_call.1} parent=5 // pred_fallthru
        _
      %p645 = scmp.le.s32.totalorder 2, %s16
      // Predicated region
      $region57: #{tpu_custom_call.1} parent=5 // pred_check
        %p646 = pneg %p645
      $region58: #{tpu_custom_call.1} parent=5 // pred_check_branch
        %648 = sbr.rel (%p646) target = $region60
      $region59: #{tpu_custom_call.1} parent=5 // pred_region
        %s649 = ssub.s32 %s16, 2
        // Predicated region
        $region61: #{tpu_custom_call.1} parent=59 // pred_check
          %p650 = pneg %p182
        $region62: #{tpu_custom_call.1} parent=59 // pred_check_branch
          %652 = sbr.rel (%p650) target = $region64
        $region63: #{tpu_custom_call.1} parent=59 // pred_region
          %s653 = sand.u32 %s167, 1
          %s654 = scalar_lea.sflag [#allocation4], %s653
          %s655 = sand.u32 %s167, 1
          %s656 = smul.addr %s655, 8
          %s657 = scalar_lea.vmem [#allocation3], %s656
          %658 = dma.done %s654, 128
        $region64: #{tpu_custom_call.1} parent=59 // pred_fallthru
          _
        // Predicated region
        $region65: #{tpu_custom_call.1} parent=59 // pred_check
          %p659 = pneg %p210
        $region66: #{tpu_custom_call.1} parent=59 // pred_check_branch
          %661 = sbr.rel (%p659) target = $region68
        $region67: #{tpu_custom_call.1} parent=59 // pred_region
          %p662 = scmp.lt.s32.totalorder %s29, 1
          %s663 = scalar_select %p662, %s29, 1
          %p664 = scmp.lt.s32.totalorder %s30, 0
          %s665 = scalar_select %p664, %s30, 0
          %s666 = smul.addr %s665, 4
          %s667 = smul.addr %s663, 4
          %s668 = sadd.s32 %s666, %s667
          %s669 = smul.addr %s668, 8
          %s670 = scalar_lea.vmem %s6, %s669
        $region68: #{tpu_custom_call.1} parent=59 // pred_fallthru
          _
      $region60: #{tpu_custom_call.1} parent=5 // pred_fallthru
        _
    $region6: #{tpu_custom_call.1} parent=1 // loop_footer
      %s20 = sadd.s32 1, %s16
    $region7: #{tpu_custom_call.1} parent=1 // loop_footer_branch
      %15 = sbr.rel target = $region3
    $region8: #{tpu_custom_call.1} parent=1 // loop_exit
      _
    %671 = vsyncpa [#allocation4], 1
    %s672 = scalar_lea.sflag [#allocation4], 1
    %673 = vsyncpa %s672, 1

</llo_original>
